<compile_context>
chip_gen: v7x
topology: tpu7x:2x2x1
jax: 0.10.0
libtpu: 0.0.40
codegen_flags: <defaults>
</compile_context>

<pallas_src>
import jax
import jax.numpy as jnp
from jax.experimental import pallas as pl
from jax.experimental.pallas import tpu as pltpu

LANE = 128
MAX_TILE_LANES = 2048               # 512-2048 already reaches ~85% of HBM roofline
VMEM_BUDGET = 12 * 1024 * 1024      # stay inside v5e's 16 MiB default scoped VMEM

_SQUEEZED = pl.Squeezed() if hasattr(pl, "Squeezed") else None


def downsample_conv_kernel(p_ref, w_ref, b_ref, o_ref):
    """One (batch, lane-tile) grid step of the im2col GEMM + bias.

    p_ref : (9*C, TN) bf16  im2col patches (rows: c_in-major, 3x3-tap-minor)
    w_ref : (C, 9*C)  bf16  conv weight, VMEM-resident (constant index_map)
    b_ref : (C, 1)    f32   bias, VMEM-resident
    o_ref : (C, TN)   f32   output channels x flattened (oh, ow) lanes
    """
    acc = jnp.dot(w_ref[...], p_ref[...], preferred_element_type=jnp.float32)
    o_ref[...] = (acc + b_ref[...]).astype(o_ref.dtype)


def _resident_spec(block_shape, nbytes):
    """Constant-index (VMEM-resident) input spec; single-buffer it when big."""
    index_map = lambda b, i: (0, 0)
    if nbytes >= (1 << 20) and hasattr(pl, "Buffered"):
        try:
            return pl.BlockSpec(block_shape, index_map,
                                pipeline_mode=pl.Buffered(1))
        except (TypeError, ValueError):
            pass
    return pl.BlockSpec(block_shape, index_map)


class DownsamplePallas:
    """Pallas TPU implementation of Downsample: y = Conv2d(dim, dim, 3, 2, 1)(x)."""

    def __init__(self, dim, key=None):
        self.dim = dim
        if key is None:
            key = jax.random.PRNGKey(1)
        wk, bk = jax.random.split(key)
        fan_in = dim * 9
        bound = 1.0 / (fan_in ** 0.5)      # PyTorch Conv2d default init range
        self.weight = jax.random.uniform(wk, (dim, dim, 3, 3), jnp.float32,
                                         -bound, bound)
        self.bias = jax.random.uniform(bk, (dim,), jnp.float32, -bound, bound)

    def forward(self, x):
        B, C, H, W = x.shape
        assert C == self.dim
        Ho = (H + 2 - 3) // 2 + 1
        Wo = (W + 2 - 3) // 2 + 1
        Np = Ho * Wo

        # ---- im2col: wrapper-side layout only, no HBM transposes ----
        xpad = jnp.pad(x.astype(jnp.float32), ((0, 0), (0, 0), (1, 1), (1, 1)))
        taps = []
        for kh in range(3):
            for kw in range(3):
                taps.append(xpad[:, :, kh:kh + 2 * Ho - 1:2, kw:kw + 2 * Wo - 1:2])
        patches = jnp.stack(taps, axis=2)                 # (B, C, 9, Ho, Wo)
        patches = patches.reshape(B, C * 9, Np)           # rows: c_in*9 + (kh*3+kw)
        patches = patches.astype(jnp.bfloat16)            # halve streamed DMA bytes

        # ---- lane tile from a VMEM budget (generation-aware, not a fixed cap) ----
        per_lane = 2 * (9 * C * 2 + C * 4)                # dbl-buffered in(bf16)+out(f32)
        resident = C * 9 * C * 2 * 2 + C * 4 * 2          # weight + bias (worst-case 2 bufs)
        tn = max(LANE, ((VMEM_BUDGET - resident) // per_lane) // LANE * LANE)
        tn = min(tn, MAX_TILE_LANES)                      # keep v7x's 2nd TC busy
        tn = min(tn, pl.cdiv(Np, LANE) * LANE)            # don't exceed problem size
        n_pad = pl.cdiv(Np, tn) * tn
        if n_pad != Np:
            patches = jnp.pad(patches, ((0, 0), (0, 0), (0, n_pad - Np)))
        grid = (B, n_pad // tn)

        w2 = self.weight.reshape(C, C * 9).astype(jnp.bfloat16)   # (c_out, c_in*9)
        b2 = self.bias.reshape(C, 1)

        vmem_limit = int(min(max(resident + per_lane * tn + (4 << 20), 32 << 20),
                             56 << 20))
        cost = pl.CostEstimate(
            flops=2 * C * (9 * C) * (B * n_pad),
            transcendentals=0,
            bytes_accessed=(B * 9 * C * n_pad * 2      # patch stream (bf16)
                            + C * 9 * C * 2            # weight (bf16, resident)
                            + C * 4                    # bias
                            + B * C * n_pad * 4))      # output (f32)

        out = pl.pallas_call(
            downsample_conv_kernel,
            out_shape=jax.ShapeDtypeStruct((B, C, n_pad), jnp.float32),
            grid=grid,
            in_specs=[
                # patches: batch is a squeezed grid axis, lane tiles streamed
                pl.BlockSpec((_SQUEEZED, C * 9, tn), lambda b, i: (b, 0, i)),
                _resident_spec((C, C * 9), C * 9 * C * 2),   # weight (resident)
                _resident_spec((C, 1), C * 4),               # bias   (resident)
            ],
            out_specs=pl.BlockSpec((_SQUEEZED, C, tn), lambda b, i: (b, 0, i)),
            compiler_params=pltpu.CompilerParams(
                dimension_semantics=("parallel", "parallel"),
                vmem_limit_bytes=vmem_limit),
            cost_estimate=cost,
        )(patches, w2, b2)

        # (B, C, Ho*Wo) -> (B, C, Ho, Wo): metadata-only reshape, no transpose.
        return out[:, :, :Np].reshape(B, C, Ho, Wo)

    def reference(self, x):
        y = jax.lax.conv_general_dilated(
            x.astype(jnp.float32), self.weight, window_strides=(2, 2),
            padding=((1, 1), (1, 1)),
            dimension_numbers=("NCHW", "OIHW", "NCHW"))
        return y + self.bias[None, :, None, None]


if __name__ == "__main__":
    B, C, H, W = 2, 4, 16, 16
    key = jax.random.PRNGKey(0)
    xkey, pkey = jax.random.split(key)
    x = jax.random.normal(xkey, (B, C, H, W), jnp.float32)

    model = DownsamplePallas(dim=C, key=pkey)
    y = jax.block_until_ready(model.forward(x))
    y_ref = jax.block_until_ready(model.reference(x))

    assert y.shape == (B, C, H // 2, W // 2), y.shape
    err = float(jnp.max(jnp.abs(y - y_ref)))
    # bf16 patch/weight stream with f32 accumulation -> widened tolerance.
    assert jnp.allclose(y, y_ref, atol=5e-2, rtol=5e-2), err

    print("KERNEL_OK")
</pallas_src>

<mosaic_0001>
module attributes {stable_mosaic.version = 11 : i64} {
  func.func @downsample_conv_kernel(%arg0: i32, %arg1: i32, %arg2: memref<1x36x128xbf16, #tpu.memory_space<vmem>>, %arg3: memref<4x36xbf16, #tpu.memory_space<vmem>>, %arg4: memref<4x1xf32, #tpu.memory_space<vmem>>, %arg5: memref<1x4x128xf32, #tpu.memory_space<vmem>>) attributes {dimension_semantics = [#tpu.dimension_semantics<parallel>, #tpu.dimension_semantics<parallel>], iteration_bounds = array<i64: 2, 1>, scalar_prefetch = 0 : i64, scratch_operands = 0 : i64, tpu.core_type = #tpu.core_type<tc>, window_params = [{transform_indices = @transform_0, window_bounds = array<i64: 1, 36, 128>}, {pipeline_mode = #tpu.pipeline_mode<synchronous>, transform_indices = @transform_1, window_bounds = array<i64: 4, 36>}, {pipeline_mode = #tpu.pipeline_mode<synchronous>, transform_indices = @transform_2, window_bounds = array<i64: 4, 1>}, {transform_indices = @transform_3, window_bounds = array<i64: 1, 4, 128>}]} {
    %c0 = arith.constant 0 : index
    %c0_0 = arith.constant 0 : index
    %0 = vector.load %arg3[%c0, %c0_0] : memref<4x36xbf16, #tpu.memory_space<vmem>>, vector<4x36xbf16>
    %c0_1 = arith.constant 0 : index
    %c0_2 = arith.constant 0 : index
    %c0_3 = arith.constant 0 : index
    %1 = vector.load %arg2[%c0_1, %c0_2, %c0_3] : memref<1x36x128xbf16, #tpu.memory_space<vmem>>, vector<1x36x128xbf16>
    %2 = vector.shape_cast %1 : vector<1x36x128xbf16> to vector<36x128xbf16>
    %cst = arith.constant dense<0.000000e+00> : vector<4x128xf32>
    %3 = tpu.matmul %0, %2, %cst {dimension_numbers = #tpu.dot_dimension_numbers<[1], [0], [0], [1], [0, 0, 1, 1], [], []>} : vector<4x36xbf16>, vector<36x128xbf16>, vector<4x128xf32> -> vector<4x128xf32>
    %c0_4 = arith.constant 0 : index
    %c0_5 = arith.constant 0 : index
    %4 = vector.load %arg4[%c0_4, %c0_5] : memref<4x1xf32, #tpu.memory_space<vmem>>, vector<4x1xf32>
    %5 = vector.broadcast %4 : vector<4x1xf32> to vector<4x128xf32>
    %6 = arith.addf %3, %5 : vector<4x128xf32>
    %c0_6 = arith.constant 0 : index
    %c0_7 = arith.constant 0 : index
    %c0_8 = arith.constant 0 : index
    %7 = vector.load %arg5[%c0_6, %c0_7, %c0_8] : memref<1x4x128xf32, #tpu.memory_space<vmem>>, vector<1x4x128xf32>
    %8 = vector.shape_cast %7 : vector<1x4x128xf32> to vector<4x128xf32>
    %9 = vector.shape_cast %6 : vector<4x128xf32> to vector<1x4x128xf32>
    tpu.vector_store %arg5[%c0_6, %c0_7, %c0_8], %9 {strides = array<i32>} : memref<1x4x128xf32, #tpu.memory_space<vmem>>, vector<1x4x128xf32>,
    return
  }
  func.func @transform_0(%arg0: i32, %arg1: i32) -> (i32, i32, i32) {
    %c0_i32 = arith.constant 0 : i32
    %c0_i32_0 = arith.constant 0 : i32
    return %arg0, %c0_i32, %arg1 : i32, i32, i32
  }
  func.func @transform_1(%arg0: i32, %arg1: i32) -> (i32, i32) {
    %c0_i32 = arith.constant 0 : i32
    %c0_i32_0 = arith.constant 0 : i32
    %c0_i32_1 = arith.constant 0 : i32
    return %c0_i32, %c0_i32_0 : i32, i32
  }
  func.func @transform_2(%arg0: i32, %arg1: i32) -> (i32, i32) {
    %c0_i32 = arith.constant 0 : i32
    %c0_i32_0 = arith.constant 0 : i32
    %c0_i32_1 = arith.constant 0 : i32
    return %c0_i32, %c0_i32_0 : i32, i32
  }
  func.func @transform_3(%arg0: i32, %arg1: i32) -> (i32, i32, i32) {
    %c0_i32 = arith.constant 0 : i32
    %c0_i32_0 = arith.constant 0 : i32
    return %arg0, %c0_i32, %arg1 : i32, i32, i32
  }
}

</mosaic_0001>

<llo_original>
// kernel: tpu_custom_call.1
$region0: #{tpu_custom_call.1}
  #allocation0 [shape = 'u32[]', space=smem, size = 0x4, offset = 0x4, fixed_abs, tag = 'smem constant byte address 0x4 - core index']
  #allocation1 [shape = 'u32[144,128]{1,0:T(1,128)}', space=vmem, size = 0x12000, scoped, tag = 'internal scratch']
  %s0 = inlined_call_operand.vmem [shape: bf16[2,36,128], index: 0, kind: input, shape index: {}]
  %s1 = inlined_call_operand.vmem [shape: bf16[4,36], index: 1, kind: input, shape index: {}]
  %s2 = inlined_call_operand.vmem [shape: f32[4,1], index: 2, kind: input, shape index: {}]
  %s3 = inlined_call_operand.hbm [shape: f32[2,4,128], index: 3, kind: output, shape index: {}]
  %s4 = sld [smem:[#allocation0]]
  $region45: #{tpu_custom_call.1} parent=0
    _
  %s6 = ssub.s32 1, %s4
  %s7 = scalar_select 0, %s6, %s4
  $region1: #{tpu_custom_call.1} parent=0
    #allocation2 [shape = 'u8[4096]{0}', space=vmem, size = 0x1000, scoped, tag = 'output window, operand 0']
    #allocation3 [shape = 's32[2]{0}', space=sflag, size = 0x8, scoped, tag = 'scoped memory for tpu_custom_call.1']
    %8 = vsyncpa [#allocation3], 0
    %s9 = scalar_lea.sflag [#allocation3], 1
    %10 = vsyncpa %s9, 0
    loop: start=0, step=1, limit=4
    $region2: #{tpu_custom_call.1} parent=1 // loop_pre_header
      _
    $region3: #{tpu_custom_call.1} parent=1 // loop_header
      %s12 = sphi 0, %s16
      %p13 = scmp.ge.s32.totalorder %s12, 4
      %s19 = sphi 0, %s31
      %s20 = sphi 0, %s27
      %s21 = sphi 0, %s19
      %s22 = sphi 0, %s20
      %s23 = sphi 0, %s21
      %s24 = sphi 0, %s22
      %s36 = sphi 0, %s38
      %s39 = sphi 0, %s36
      %s40 = sphi 0, %s39
      %s56 = sphi 0, %s40
      %s60 = sphi 0, %s60
      %s62 = sphi 0, %s60
      %s63 = sphi 0, %s62
      %s77 = sphi 0, %s63
      %s81 = sphi 0, %s81
      %s83 = sphi 0, %s81
      %s84 = sphi 0, %s83
      %s98 = sphi 0, %s84
      %s106 = sphi 0, %s108
      %s109 = sphi 0, %s106
      %s110 = sphi 0, %s109
      %s126 = sphi 0, %s110
    $region4: #{tpu_custom_call.1} parent=1 // loop_header_branch
      %15 = sbr.rel (%p13) target = $region8
    $region5: #{tpu_custom_call.1} parent=1 // loop_body
      %s17 = ssub.s32 %s12, 1
      %s18 = ssub.s32 %s12, 2
      %s25 = sadd.s32 1, %s20
      %p26 = scmp.ge.s32.totalorder %s25, 1
      %s27 = scalar_select %p26, 0, %s25
      %s28 = sadd.s32 1, %s19
      %s29 = scalar_select %p26, %s28, %s19
      %p30 = scmp.ge.s32.totalorder %s29, 2
      %s31 = scalar_select %p30, 0, %s29
      %s32 = ssub.s32 %s19, %s31
      %s33 = ssub.s32 %s20, %s27
      %s34 = sor.u32 %s32, %s33
      %p35 = scmp.eq.s32.totalorder %s34, 0
      %s37 = sadd.s32 %s36, 1
      %s38 = scalar_select %p35, %s36, %s37
      %p41 = pneg %p35
      %p42 = scmp.eq.s32.totalorder %s12, 1
      %p43 = por %p41, %p42
      %p44 = scmp.ne.s32.totalorder %s36, %s39
      %p45 = scmp.eq.s32.totalorder %s12, 0
      %p46 = por %p44, %p45
      %p47 = scmp.ne.s32.totalorder %s36, %s39
      %p48 = scmp.eq.s32.totalorder %s17, 1
      %p49 = por %p47, %p48
      %p50 = scmp.ne.s32.totalorder %s39, %s40
      %p51 = scmp.eq.s32.totalorder %s17, 0
      %p52 = por %p50, %p51
      %p53 = scmp.ne.s32.totalorder %s39, %s40
      %p54 = scmp.eq.s32.totalorder %s18, 1
      %p55 = por %p53, %p54
      %p57 = scmp.ne.s32.totalorder %s40, %s56
      %p58 = scmp.eq.s32.totalorder %s18, 0
      %p59 = por %p57, %p58
      %s61 = sadd.s32 %s60, 1
      %p64 = scmp.eq.s32.totalorder %s12, 1
      %p65 = scmp.ne.s32.totalorder %s60, %s62
      %p66 = scmp.eq.s32.totalorder %s12, 0
      %p67 = por %p65, %p66
      %p68 = scmp.ne.s32.totalorder %s60, %s62
      %p69 = scmp.eq.s32.totalorder %s17, 1
      %p70 = por %p68, %p69
      %p71 = scmp.ne.s32.totalorder %s62, %s63
      %p72 = scmp.eq.s32.totalorder %s17, 0
      %p73 = por %p71, %p72
      %p74 = scmp.ne.s32.totalorder %s62, %s63
      %p75 = scmp.eq.s32.totalorder %s18, 1
      %p76 = por %p74, %p75
      %p78 = scmp.ne.s32.totalorder %s63, %s77
      %p79 = scmp.eq.s32.totalorder %s18, 0
      %p80 = por %p78, %p79
      %s82 = sadd.s32 %s81, 1
      %p85 = scmp.eq.s32.totalorder %s12, 1
      %p86 = scmp.ne.s32.totalorder %s81, %s83
      %p87 = scmp.eq.s32.totalorder %s12, 0
      %p88 = por %p86, %p87
      %p89 = scmp.ne.s32.totalorder %s81, %s83
      %p90 = scmp.eq.s32.totalorder %s17, 1
      %p91 = por %p89, %p90
      %p92 = scmp.ne.s32.totalorder %s83, %s84
      %p93 = scmp.eq.s32.totalorder %s17, 0
      %p94 = por %p92, %p93
      %p95 = scmp.ne.s32.totalorder %s83, %s84
      %p96 = scmp.eq.s32.totalorder %s18, 1
      %p97 = por %p95, %p96
      %p99 = scmp.ne.s32.totalorder %s84, %s98
      %p100 = scmp.eq.s32.totalorder %s18, 0
      %p101 = por %p99, %p100
      %s102 = ssub.s32 %s19, %s31
      %s103 = ssub.s32 %s20, %s27
      %s104 = sor.u32 %s102, %s103
      %p105 = scmp.eq.s32.totalorder %s104, 0
      %s107 = sadd.s32 %s106, 1
      %s108 = scalar_select %p105, %s106, %s107
      %p111 = pneg %p105
      %p112 = scmp.eq.s32.totalorder %s12, 1
      %p113 = por %p111, %p112
      %p114 = scmp.ne.s32.totalorder %s106, %s109
      %p115 = scmp.eq.s32.totalorder %s12, 0
      %p116 = por %p114, %p115
      %p117 = scmp.ne.s32.totalorder %s106, %s109
      %p118 = scmp.eq.s32.totalorder %s17, 1
      %p119 = por %p117, %p118
      %p120 = scmp.ne.s32.totalorder %s109, %s110
      %p121 = scmp.eq.s32.totalorder %s17, 0
      %p122 = por %p120, %p121
      %p123 = scmp.ne.s32.totalorder %s109, %s110
      %p124 = scmp.eq.s32.totalorder %s18, 1
      %p125 = por %p123, %p124
      %p127 = scmp.ne.s32.totalorder %s110, %s126
      %p128 = scmp.eq.s32.totalorder %s18, 0
      %p129 = por %p127, %p128
      %p130 = scmp.le.s32.totalorder 1, %s12
      %p131 = scmp.lt.s32.totalorder %s12, 3
      %p132 = pnand %p130, %p131
      %p133 = pneg %p132
      // Predicated region
      $region9: #{tpu_custom_call.1} parent=5 // pred_check
        _
      $region10: #{tpu_custom_call.1} parent=5 // pred_check_branch
        %135 = sbr.rel (%p132) target = $region12
      $region11: #{tpu_custom_call.1} parent=5 // pred_region
        %s136 = ssub.s32 %s12, 1
        // Predicated region
        $region13: #{tpu_custom_call.1} parent=11 // pred_check
          %p137 = pneg %p73
        $region14: #{tpu_custom_call.1} parent=11 // pred_check_branch
          %139 = sbr.rel (%p137) target = $region16
        $region15: #{tpu_custom_call.1} parent=11 // pred_region
          _
        $region16: #{tpu_custom_call.1} parent=11 // pred_fallthru
          _
        // Predicated region
        $region17: #{tpu_custom_call.1} parent=11 // pred_check
          %p140 = pneg %p94
        $region18: #{tpu_custom_call.1} parent=11 // pred_check_branch
          %142 = sbr.rel (%p140) target = $region20
        $region19: #{tpu_custom_call.1} parent=11 // pred_region
          _
        $region20: #{tpu_custom_call.1} parent=11 // pred_fallthru
          _
      $region12: #{tpu_custom_call.1} parent=5 // pred_fallthru
        _
      %p143 = scmp.lt.s32.totalorder %s12, 2
      // Predicated region
      $region21: #{tpu_custom_call.1} parent=5 // pred_check
        %p144 = pneg %p143
      $region22: #{tpu_custom_call.1} parent=5 // pred_check_branch
        %146 = sbr.rel (%p144) target = $region24
      $region23: #{tpu_custom_call.1} parent=5 // pred_region
        // Predicated region
        $region25: #{tpu_custom_call.1} parent=23 // pred_check
          %p147 = pneg %p46
        $region26: #{tpu_custom_call.1} parent=23 // pred_check_branch
          %149 = sbr.rel (%p147) target = $region28
        $region27: #{tpu_custom_call.1} parent=23 // pred_region
          %p150 = scmp.lt.s32.totalorder %s19, 1
          %s151 = scalar_select %p150, %s19, 1
          %p152 = scmp.lt.s32.totalorder %s20, 0
          %s153 = scalar_select %p152, %s20, 0
          %s154 = smul.addr %s151, 5
          %s155 = sadd.s32 %s153, %s154
          %s156 = smul.addr %s155, 4
          %s157 = scalar_lea.vmem %s0, %s156
        $region28: #{tpu_custom_call.1} parent=23 // pred_fallthru
          _
      $region24: #{tpu_custom_call.1} parent=5 // pred_fallthru
        _
      %p158 = scmp.le.s32.totalorder 1, %s12
      %p159 = scmp.lt.s32.totalorder %s12, 3
      %p160 = pnand %p158, %p159
      %p161 = pneg %p160
      // Predicated region
      $region29: #{tpu_custom_call.1} parent=5 // pred_check
        _
      $region30: #{tpu_custom_call.1} parent=5 // pred_check_branch
        %163 = sbr.rel (%p160) target = $region32
      $region31: #{tpu_custom_call.1} parent=5 // pred_region
        %s164 = ssub.s32 %s12, 1
        %p165 = scmp.lt.s32.totalorder %s21, 1
        %s166 = scalar_select %p165, %s21, 1
        %p167 = scmp.lt.s32.totalorder %s22, 0
        %s168 = scalar_select %p167, %s22, 0
        %s169 = smul.addr %s166, 5
        %s170 = sadd.s32 %s168, %s169
        %s171 = smul.addr %s170, 4
        %s172 = scalar_lea.vmem %s0, %s171
        %p173 = pneg %p52
        %p174 = pneg %p49
        %p175 = pneg %p73
        %p176 = pneg %p70
        %p177 = pneg %p94
        %p178 = pneg %p91
        %p179 = pneg %p122
        %p180 = pneg %p119
        %s181 = sand.u32 %s109, 1
        %s182 = scalar_lea.sflag [#allocation3], %s181
        %s183 = sand.u32 %s109, 1
        %s184 = smul.addr %s183, 4
        %s185 = scalar_lea.vmem [#allocation2], %s184
        %p186 = scmp.lt.s32.totalorder %s21, 1
        %s187 = scalar_select %p186, %s21, 1
        %p188 = scmp.lt.s32.totalorder %s22, 0
        %s189 = scalar_select %p188, %s22, 0
        %s190 = smul.addr %s187, 5
        %s191 = sadd.s32 %s189, %s190
        %s192 = smul.addr %s191, 4
        %s193 = scalar_lea.vmem %s0, %s192
        %v195 = vld [vmem:[%s1] sm:$0x3]
        %v196 = vld [vmem:[%s193] sm:$0xf]
        %v197 = vld [vmem:[%s193 + $0x4] sm:$0xf]
        %v198 = vld [vmem:[%s193 + $0x8] sm:$0xf]
        %v199 = vld [vmem:[%s193 + $0xc] sm:$0xf]
        %v200 = vld [vmem:[%s193 + $0x10] sm:$0x3]
        %v201 = vld [vmem:[%s2] sm:$0xf]
        %203 = vset.pattern.permute.xlu0 0
        %204 = vperm.xlu0 %203, %v201
        %v205 = vpop.permute.xlu0 %204
        %v212 = vunpack.c.l.b16 %v196
        %v213 = vunpack.c.l.b16 %v197
        %v214 = vunpack.c.l.b16 %v198
        %v215 = vunpack.c.l.b16 %v199
        %v216 = vunpack.c.l.b16 %v200
        %v217 = vpack.c.b16 %v213, %v212
        %v218 = vpack.c.b16 %v215, %v214
        %v219 = vpack.c.b16 %v216, %v216
        %vm222 = vcmask 293888
        %v224 = vsel %vm222, %v195, 0
        %vm226 = vcmask 1041408
        %v228 = vsel %vm226, %v219, 0
        %230 = vmatprep.subr.bf16.mxu0 0
        %231 = vmatpush1.bf16.msra.mxu0 %v217
        %232 = vmatprep.subr.bf16.mxu0 0
        %233 = vmatpush1.bf16.msra.mxu0 %v218
        %234 = vmatprep.subr.bf16.mxu0 0
        %235 = vmatpush1.bf16.msra.mxu0 %v228
        %236 = vmatprep.subr.bf16.mxu0 0
        %237 = vmatpush1.bf16.msra.mxu0 0
        %238 = vmatprep.subr.bf16.mxu0 0
        %239 = vmatpush1.bf16.msra.mxu0 0
        %240 = vmatprep.subr.bf16.mxu0 0
        %241 = vmatpush1.bf16.msra.mxu0 0
        %242 = vmatprep.subr.bf16.mxu0 0
        %243 = vmatpush1.bf16.msra.mxu0 0
        %244 = vmatprep.subr.bf16.mxu0 0
        %245 = vmatpush1.bf16.msra.mxu0 0
        %246 = vmatprep.subr.bf16.mxu0 0
        %247 = vmatpush1.bf16.msra.mxu0 0
        %248 = vmatprep.subr.bf16.mxu0 0
        %249 = vmatpush1.bf16.msra.mxu0 0
        %250 = vmatprep.subr.bf16.mxu0 0
        %251 = vmatpush1.bf16.msra.mxu0 0
        %252 = vmatprep.subr.bf16.mxu0 0
        %253 = vmatpush1.bf16.msra.mxu0 0
        %254 = vmatprep.subr.bf16.mxu0 0
        %255 = vmatpush1.bf16.msra.mxu0 0
        %256 = vmatprep.subr.bf16.mxu0 0
        %257 = vmatpush1.bf16.msra.mxu0 0
        %258 = vmatprep.subr.bf16.mxu0 0
        %259 = vmatpush1.bf16.msra.mxu0 0
        %260 = vmatprep.subr.bf16.mxu0 0
        %261 = vmatpush1.bf16.msra.mxu0 0
        %262 = vmatprep.mubr.bf16.mxu0 0
        %263 = vmatmul.mubr.bf16.gmra.mrb[0].mxu0 %v224
        %v264 = vpop.f32.mrb[0].mxu0
        %v265 = vadd.f32 %v205, %v264
        %v266 = vpop.f32.mrb[0].mxu0
        %v267 = vpop.f32.mrb[0].mxu0
        %v268 = vpop.f32.mrb[0].mxu0
        %269 = vdwg.mxu0
        %270 = vst [vmem:[%s185] sm:$0xf] %v265
        %s271 = sand.u32 %s109, 1
        %s272 = scalar_lea.sflag [#allocation3], %s271
        %s273 = sand.u32 %s109, 1
        %s274 = smul.addr %s273, 4
        %s275 = scalar_lea.vmem [#allocation2], %s274
        // Predicated region
        $region33: #{tpu_custom_call.1} parent=31 // pred_check
          %p276 = pneg %p119
        $region34: #{tpu_custom_call.1} parent=31 // pred_check_branch
          %278 = sbr.rel (%p276) target = $region36
        $region35: #{tpu_custom_call.1} parent=31 // pred_region
          %s280 = ssub.s32 64, 64
          %281 = vsyncadd %s272, %s280
          %s282 = sadd.s32 %s22, %s21
          %s283 = smul.addr %s282, 64
          %s284 = scalar_lea.hbm %s3, %s283
          %s286 = sshll.u32 %s275, 4
          %s287 = int_to_ptr.vmem [resolvable:$true] %s286
          %289 = dma.vmem_to_hbm [thread:$0]  %s287, 64, %s284, %s272
        $region36: #{tpu_custom_call.1} parent=31 // pred_fallthru
          _
      $region32: #{tpu_custom_call.1} parent=5 // pred_fallthru
        _
      %p290 = scmp.le.s32.totalorder 2, %s12
      // Predicated region
      $region37: #{tpu_custom_call.1} parent=5 // pred_check
        %p291 = pneg %p290
      $region38: #{tpu_custom_call.1} parent=5 // pred_check_branch
        %293 = sbr.rel (%p291) target = $region40
      $region39: #{tpu_custom_call.1} parent=5 // pred_region
        %s294 = ssub.s32 %s12, 2
        // Predicated region
        $region41: #{tpu_custom_call.1} parent=39 // pred_check
          %p295 = pneg %p125
        $region42: #{tpu_custom_call.1} parent=39 // pred_check_branch
          %297 = sbr.rel (%p295) target = $region44
        $region43: #{tpu_custom_call.1} parent=39 // pred_region
          %s298 = sand.u32 %s110, 1
          %s299 = scalar_lea.sflag [#allocation3], %s298
          %s300 = sand.u32 %s110, 1
          %s301 = smul.addr %s300, 4
          %s302 = scalar_lea.vmem [#allocation2], %s301
          %303 = dma.done %s299, 64
        $region44: #{tpu_custom_call.1} parent=39 // pred_fallthru
          _
      $region40: #{tpu_custom_call.1} parent=5 // pred_fallthru
        _
    $region6: #{tpu_custom_call.1} parent=1 // loop_footer
      %s16 = sadd.s32 1, %s12
    $region7: #{tpu_custom_call.1} parent=1 // loop_footer_branch
      %11 = sbr.rel target = $region3
    $region8: #{tpu_custom_call.1} parent=1 // loop_exit
      _
    %304 = vsyncpa [#allocation3], 1
    %s305 = scalar_lea.sflag [#allocation3], 1
    %306 = vsyncpa %s305, 1

</llo_original>
